<compile_context>
chip_gen: v6e
topology: v6e:2x2x1
jax: 0.10.0
libtpu: 0.0.40
codegen_flags: <defaults>
</compile_context>

<pallas_src>
import math

import jax
import jax.numpy as jnp
from jax import lax
from jax.experimental import pallas as pl
from jax.experimental.pallas import tpu as pltpu

_VMEM_LIMIT = 32 * 1024 * 1024  # explicit scoped-VMEM budget (safe on v5e/v6e/v7x)


def _is_v5():
    try:
        return "v5" in jax.devices()[0].device_kind.lower()
    except Exception:  # pragma: no cover - defensive only
        return False


# --------------------------------------------------------------------------
# Per-head projection kernel:  out[b, h, s, :] = x[b, s, :] @ w[h]   (no bias)
# Heads-to-batch transpose is fused into the output BlockSpec; no accumulator
# scratch (full-K block); operands cast to compute_dtype in-kernel.
# --------------------------------------------------------------------------
def _make_proj_kernel(compute_dtype):
    def kernel(x_ref, w_ref, o_ref):
        x = x_ref[0]                      # (ts, K)
        w = w_ref[0]                      # (K, D)
        if compute_dtype is not None:
            if x.dtype != compute_dtype:
                x = x.astype(compute_dtype)
            if w.dtype != compute_dtype:
                w = w.astype(compute_dtype)
        o_ref[0, 0] = jnp.dot(x, w, preferred_element_type=jnp.float32
                              ).astype(o_ref.dtype)
    return kernel


def pallas_head_projection(x, w_heads, *, compute_dtype=None, ts_max=256):
    """x: (B, S, K); w_heads: (Hout, K, D) -> (B, Hout, S, D).

    Output dtype is compute_dtype when given (bf16 production path) so downstream
    kernels consume it directly.  K is kept as a single block (typical transformer
    widths); # TODO(synk): add a K-tiled accumulator variant if K ever exceeds VMEM.
    """
    B, S, K = x.shape
    Hout, Kw, D = w_heads.shape
    assert K == Kw
    out_dtype = compute_dtype if compute_dtype is not None else x.dtype
    ts = S if S <= ts_max else ts_max

    return pl.pallas_call(
        _make_proj_kernel(compute_dtype),
        out_shape=jax.ShapeDtypeStruct((B, Hout, S, D), out_dtype),
        grid_spec=pltpu.PrefetchScalarGridSpec(
            num_scalar_prefetch=0,
            grid=(B, pl.cdiv(S, ts), Hout),
            in_specs=[
                pl.BlockSpec((1, ts, K), lambda b, si, h: (b, si, 0)),
                pl.BlockSpec((1, K, D), lambda b, si, h: (h, 0, 0)),
            ],
            out_specs=pl.BlockSpec((1, 1, ts, D), lambda b, si, h: (b, h, si, 0)),
        ),
        compiler_params=pltpu.CompilerParams(
            dimension_semantics=("parallel", "parallel", "arbitrary"),
            vmem_limit_bytes=_VMEM_LIMIT),
    )(x, w_heads)


# --------------------------------------------------------------------------
# Flash attention: softmax(q k^T * scale) v with online softmax.
# q: (B, QH, Sq, D), kv: (B, KVH, Sk, D); K and V heads are selected purely via
# the index_maps (k_head_off / v_head_off), so a fused KV (or QKV) projection
# output can be consumed without any split or transpose.
# --------------------------------------------------------------------------
def _make_flash_kernel(scale, sk_actual, tkv, need_mask, approx_recip):
    def kernel(q_ref, k_ref, v_ref, o_ref, m_sc, l_sc, acc_sc):
        ki = pl.program_id(3)

        @pl.when(ki == 0)
        def _():
            m_sc[...] = jnp.full_like(m_sc, -jnp.inf)
            l_sc[...] = jnp.zeros_like(l_sc)
            acc_sc[...] = jnp.zeros_like(acc_sc)

        q = q_ref[0, 0]                               # (tq, D)
        k = k_ref[0, 0]                               # (tkv, D)
        s = lax.dot_general(q, k, (((1,), (1,)), ((), ())),
                            preferred_element_type=jnp.float32) * scale
        if need_mask:                                 # zero-padded kv tail only
            col = lax.broadcasted_iota(jnp.int32, s.shape, 1) + ki * tkv
            s = jnp.where(col < sk_actual, s, -1e30)

        m_prev = m_sc[...]
        m_new = jnp.maximum(m_prev, s.max(axis=-1, keepdims=True))
        alpha = jnp.exp(m_prev - m_new)
        p = jnp.exp(s - m_new)
        l_sc[...] = alpha * l_sc[...] + p.sum(axis=-1, keepdims=True)
        acc_sc[...] = alpha * acc_sc[...] + jnp.dot(
            p.astype(v_ref.dtype), v_ref[0, 0],
            preferred_element_type=jnp.float32)
        m_sc[...] = m_new

        @pl.when(ki == pl.num_programs(3) - 1)
        def _():
            if approx_recip:
                o = acc_sc[...] * pl.reciprocal(l_sc[...], approx=True)
            else:
                o = acc_sc[...] / l_sc[...]
            o_ref[0, 0] = o.astype(o_ref.dtype)
    return kernel


def pallas_flash_attention(q_arr, kv_arr, *, heads, q_head_off, k_head_off,
                           v_head_off, scale, compute_dtype=None,
                           tq_max=None, tkv_max=None):
    """q_arr: (B, QH, Sq, D); kv_arr: (B, KVH, Sk, D) -> (B, heads, Sq, D)."""
    B, _, Sq, D = q_arr.shape
    _, _, Sk, _ = kv_arr.shape
    out_dtype = q_arr.dtype

    if tq_max is None or tkv_max is None:
        v5 = _is_v5()
        tq_max = tq_max if tq_max is not None else (128 if v5 else 256)
        tkv_max = tkv_max if tkv_max is not None else (256 if v5 else 512)

    tq = Sq if Sq <= tq_max else tq_max

    if Sk <= tkv_max:
        tkv, need_mask = Sk, False
    else:
        tkv = tkv_max
        need_mask = (Sk % tkv) != 0
        if need_mask:
            # Rare path (large, non-divisible Sk): zero-pad so no garbage rows
            # ever reach the PV matmul; padded score columns are masked in-kernel.
            pad = (-Sk) % tkv
            kv_arr = jnp.pad(kv_arr, ((0, 0), (0, 0), (0, pad), (0, 0)))
    Skp = kv_arr.shape[2]

    kernel = _make_flash_kernel(scale, Sk, tkv, need_mask,
                                approx_recip=(compute_dtype is not None))
    # TODO(synk): for very large Sk, sweep pipeline_mode=pl.Buffered(3) on k/v specs.
    return pl.pallas_call(
        kernel,
        out_shape=jax.ShapeDtypeStruct((B, heads, Sq, D), out_dtype),
        grid_spec=pltpu.PrefetchScalarGridSpec(
            num_scalar_prefetch=0,
            grid=(B, heads, pl.cdiv(Sq, tq), Skp // tkv),
            in_specs=[
                pl.BlockSpec((1, 1, tq, D),
                             lambda b, h, qi, ki: (b, q_head_off + h, qi, 0)),
                pl.BlockSpec((1, 1, tkv, D),
                             lambda b, h, qi, ki: (b, k_head_off + h, ki, 0)),
                pl.BlockSpec((1, 1, tkv, D),
                             lambda b, h, qi, ki: (b, v_head_off + h, ki, 0)),
            ],
            out_specs=pl.BlockSpec((1, 1, tq, D),
                                   lambda b, h, qi, ki: (b, h, qi, 0)),
            scratch_shapes=[
                pltpu.VMEM((tq, 1), jnp.float32),   # running max m
                pltpu.VMEM((tq, 1), jnp.float32),   # running denom l
                pltpu.VMEM((tq, D), jnp.float32),   # output accumulator
            ],
        ),
        compiler_params=pltpu.CompilerParams(
            dimension_semantics=("parallel", "parallel", "parallel", "arbitrary"),
            vmem_limit_bytes=_VMEM_LIMIT),
    )(q_arr, kv_arr, kv_arr)


# --------------------------------------------------------------------------
# Output projection:  out[b, s, :] = sum_h o[b, h, s, :] @ wo[h] + bias
# The batch-dim-to-heads transpose is folded into the head reduction axis.
# --------------------------------------------------------------------------
def _make_out_kernel(compute_dtype):
    def kernel(o_ref, w_ref, b_ref, out_ref, acc_ref):
        h = pl.program_id(2)

        @pl.when(h == 0)
        def _():
            acc_ref[...] = jnp.zeros_like(acc_ref)

        o = o_ref[0, 0]                   # (tq, D)
        w = w_ref[0]                      # (D, N)
        if compute_dtype is not None:
            if o.dtype != compute_dtype:
                o = o.astype(compute_dtype)
            if w.dtype != compute_dtype:
                w = w.astype(compute_dtype)
        acc_ref[...] += jnp.dot(o, w, preferred_element_type=jnp.float32)

        @pl.when(h == pl.num_programs(2) - 1)
        def _():
            out_ref[0] = (acc_ref[...] + b_ref[...]).astype(out_ref.dtype)
    return kernel


def pallas_out_projection(o, w_heads, bias, *, out_dtype, compute_dtype=None,
                          ts_max=256):
    """o: (B, H, S, D); w_heads: (H, D, N); bias: (N,) -> (B, S, N)."""
    B, H, S, D = o.shape
    Hw, Dw, N = w_heads.shape
    assert (H, D) == (Hw, Dw)
    ts = S if S <= ts_max else ts_max
    b2 = bias.reshape(1, N).astype(jnp.float32)

    return pl.pallas_call(
        _make_out_kernel(compute_dtype),
        out_shape=jax.ShapeDtypeStruct((B, S, N), out_dtype),
        grid_spec=pltpu.PrefetchScalarGridSpec(
            num_scalar_prefetch=0,
            grid=(B, pl.cdiv(S, ts), H),
            in_specs=[
                pl.BlockSpec((1, 1, ts, D), lambda b, si, h: (b, h, si, 0)),
                pl.BlockSpec((1, D, N), lambda b, si, h: (h, 0, 0)),
                pl.BlockSpec((1, N), lambda b, si, h: (0, 0)),
            ],
            out_specs=pl.BlockSpec((1, ts, N), lambda b, si, h: (b, si, 0)),
            scratch_shapes=[pltpu.VMEM((ts, N), jnp.float32)],
        ),
        compiler_params=pltpu.CompilerParams(
            dimension_semantics=("parallel", "parallel", "arbitrary"),
            vmem_limit_bytes=_VMEM_LIMIT),
    )(o, w_heads, b2)


# --------------------------------------------------------------------------
# Full module forward.
# --------------------------------------------------------------------------
def memory_efficient_cross_attention(x, context, params, *, heads, dim_head,
                                     compute_dtype=None):
    """x: (B, Nq, query_dim); context: (B, Nk, context_dim) or None (self-attn).

    compute_dtype=jnp.bfloat16 is the production setting (bf16 MXU operands and
    bf16 intermediates with f32 accumulation); None keeps everything in x.dtype.
    """
    # TODO(synk): hypernetwork / noise_cond context rewrite not implemented
    #             (class-level state, defaults to None/False in the reference).
    # TODO(synk): mask path not implemented (reference raises NotImplementedError).
    wq, wk, wv, wo, bo = params            # (in_features, out_features) == torch W.T
    B, Nq, query_dim = x.shape
    scale = dim_head ** (-0.5)

    def to_head_weights(w, n_heads):
        # (K, n_heads*D) -> (n_heads, K, D).  One-time weight relayout; in a real
        # deployment this is pre-computed once at parameter-load time.
        return w.reshape(w.shape[0], n_heads, dim_head).transpose(1, 0, 2)

    if context is None:
        # Self-attention: fuse Q/K/V into one projection pass over x.
        wqkv = to_head_weights(jnp.concatenate([wq, wk, wv], axis=1), 3 * heads)
        qkv = pallas_head_projection(x, wqkv, compute_dtype=compute_dtype)
        q_arr, kv_arr = qkv, qkv                       # (B, 3H, Nq, D)
        q_off, k_off, v_off = 0, heads, 2 * heads
    else:
        # Cross-attention: Q from x, fused K/V from context (one pass over context).
        wq_h = to_head_weights(wq, heads)                               # (H, Kq, D)
        wkv_h = to_head_weights(jnp.concatenate([wk, wv], axis=1), 2 * heads)
        q_arr = pallas_head_projection(x, wq_h, compute_dtype=compute_dtype)
        kv_arr = pallas_head_projection(context, wkv_h, compute_dtype=compute_dtype)
        q_off, k_off, v_off = 0, 0, heads

    o = pallas_flash_attention(q_arr, kv_arr, heads=heads, q_head_off=q_off,
                               k_head_off=k_off, v_head_off=v_off, scale=scale,
                               compute_dtype=compute_dtype)   # (B, H, Nq, D)

    # to_out = Linear(inner, query_dim) + Dropout(p=0.0) (identity).
    wo_h = wo.reshape(heads, dim_head, query_dim)   # free reshape, no transpose
    return pallas_out_projection(o, wo_h, bo, out_dtype=x.dtype,
                                 compute_dtype=compute_dtype)  # (B, Nq, query_dim)


# --------------------------------------------------------------------------
# Params init (nn.Linear default: uniform +-1/sqrt(fan_in)) and pure-JAX reference.
# --------------------------------------------------------------------------
def _init_params(key, query_dim, context_dim, heads, dim_head):
    inner = heads * dim_head
    ks = jax.random.split(key, 5)

    def lin(kk, fan_in, fan_out):
        lim = 1.0 / math.sqrt(fan_in)
        return jax.random.uniform(kk, (fan_in, fan_out), jnp.float32, -lim, lim)

    wq = lin(ks[0], query_dim, inner)
    wk = lin(ks[1], context_dim, inner)
    wv = lin(ks[2], context_dim, inner)
    wo = lin(ks[3], inner, query_dim)
    lim = 1.0 / math.sqrt(inner)
    bo = jax.random.uniform(ks[4], (query_dim,), jnp.float32, -lim, lim)
    return wq, wk, wv, wo, bo


def _reference(x, context, params, heads, dim_head):
    wq, wk, wv, wo, bo = params
    B, Nq, _ = x.shape
    ctx = x if context is None else context
    Nk = ctx.shape[1]
    q = x @ wq
    k = ctx @ wk
    v = ctx @ wv
    q = q.reshape(B, Nq, heads, dim_head).transpose(0, 2, 1, 3)
    k = k.reshape(B, Nk, heads, dim_head).transpose(0, 2, 1, 3)
    v = v.reshape(B, Nk, heads, dim_head).transpose(0, 2, 1, 3)
    s = jnp.einsum('bhqd,bhkd->bhqk', q, k) * (dim_head ** (-0.5))
    p = jax.nn.softmax(s, axis=-1)
    o = jnp.einsum('bhqk,bhkd->bhqd', p, v)
    o = o.transpose(0, 2, 1, 3).reshape(B, Nq, heads * dim_head)
    return o @ wo + bo


if __name__ == "__main__":
    # Small shapes consistent with the module: cross-attention with
    # query_dim=32, context_dim=48, heads=4, dim_head=32 -> inner_dim=128.
    B, Nq, Nk = 2, 8, 16
    query_dim, context_dim = 32, 48
    heads, dim_head = 4, 32

    key = jax.random.PRNGKey(0)
    kx, kc, kp, kp2 = jax.random.split(key, 4)
    x = jax.random.normal(kx, (B, Nq, query_dim), jnp.float32)
    context = jax.random.normal(kc, (B, Nk, context_dim), jnp.float32)
    params = _init_params(kp, query_dim, context_dim, heads, dim_head)

    ref = _reference(x, context, params, heads, dim_head)

    # Exact-precision path (f32 everywhere) for the correctness check.
    out = memory_efficient_cross_attention(x, context, params, heads=heads,
                                           dim_head=dim_head, compute_dtype=None)
    out = jax.block_until_ready(out)
    assert out.shape == (B, Nq, query_dim)
    assert jnp.allclose(out, ref, atol=1e-4, rtol=1e-4), "f32 mismatch vs reference"

    # Production path: bf16 MXU operands / bf16 intermediates, f32 accumulation.
    out_bf16 = memory_efficient_cross_attention(x, context, params, heads=heads,
                                                dim_head=dim_head,
                                                compute_dtype=jnp.bfloat16)
    out_bf16 = jax.block_until_ready(out_bf16)
    assert out_bf16.shape == (B, Nq, query_dim)
    assert jnp.allclose(out_bf16, ref, atol=5e-2, rtol=5e-2), "bf16 mismatch"

    # Self-attention path (context=None) exercises the fused-QKV projection.
    params_self = _init_params(kp2, query_dim, query_dim, heads, dim_head)
    ref_self = _reference(x, None, params_self, heads, dim_head)
    out_self = memory_efficient_cross_attention(x, None, params_self, heads=heads,
                                                dim_head=dim_head,
                                                compute_dtype=None)
    out_self = jax.block_until_ready(out_self)
    assert jnp.allclose(out_self, ref_self, atol=1e-4, rtol=1e-4), "self-attn mismatch"

    print("KERNEL_OK")
</pallas_src>

<mosaic_0001>
module attributes {stable_mosaic.version = 11 : i64} {
  func.func @kernel(%arg0: i32, %arg1: i32, %arg2: i32, %arg3: memref<1x8x32xf32, #tpu.memory_space<vmem>>, %arg4: memref<1x32x32xf32, #tpu.memory_space<vmem>>, %arg5: memref<1x1x8x32xf32, #tpu.memory_space<vmem>>) attributes {dimension_semantics = [#tpu.dimension_semantics<parallel>, #tpu.dimension_semantics<parallel>, #tpu.dimension_semantics<arbitrary>], iteration_bounds = array<i64: 2, 1, 4>, scalar_prefetch = 0 : i64, scratch_operands = 0 : i64, tpu.core_type = #tpu.core_type<tc>, window_params = [{transform_indices = @transform_0, window_bounds = array<i64: 1, 8, 32>}, {transform_indices = @transform_1, window_bounds = array<i64: 1, 32, 32>}, {transform_indices = @transform_2, window_bounds = array<i64: 1, 1, 8, 32>}]} {
    %c0 = arith.constant 0 : index
    %c0_0 = arith.constant 0 : index
    %c0_1 = arith.constant 0 : index
    %0 = vector.load %arg3[%c0, %c0_0, %c0_1] : memref<1x8x32xf32, #tpu.memory_space<vmem>>, vector<1x8x32xf32>
    %1 = vector.shape_cast %0 : vector<1x8x32xf32> to vector<8x32xf32>
    %c0_2 = arith.constant 0 : index
    %c0_3 = arith.constant 0 : index
    %c0_4 = arith.constant 0 : index
    %2 = vector.load %arg4[%c0_2, %c0_3, %c0_4] : memref<1x32x32xf32, #tpu.memory_space<vmem>>, vector<1x32x32xf32>
    %3 = vector.shape_cast %2 : vector<1x32x32xf32> to vector<32x32xf32>
    %cst = arith.constant dense<0.000000e+00> : vector<8x32xf32>
    %4 = tpu.matmul %1, %3, %cst {dimension_numbers = #tpu.dot_dimension_numbers<[1], [0], [0], [1], [0, 0, 1, 1], [], []>} : vector<8x32xf32>, vector<32x32xf32>, vector<8x32xf32> -> vector<8x32xf32>
    %c0_5 = arith.constant 0 : index
    %c0_6 = arith.constant 0 : index
    %c0_7 = arith.constant 0 : index
    %c0_8 = arith.constant 0 : index
    %5 = vector.load %arg5[%c0_5, %c0_6, %c0_7, %c0_8] : memref<1x1x8x32xf32, #tpu.memory_space<vmem>>, vector<1x1x8x32xf32>
    %6 = vector.shape_cast %5 : vector<1x1x8x32xf32> to vector<8x32xf32>
    %7 = vector.shape_cast %4 : vector<8x32xf32> to vector<1x1x8x32xf32>
    tpu.vector_store %arg5[%c0_5, %c0_6, %c0_7, %c0_8], %7 {strides = array<i32>} : memref<1x1x8x32xf32, #tpu.memory_space<vmem>>, vector<1x1x8x32xf32>,
    return
  }
  func.func @transform_0(%arg0: i32, %arg1: i32, %arg2: i32) -> (i32, i32, i32) {
    %c0_i32 = arith.constant 0 : i32
    %c0_i32_0 = arith.constant 0 : i32
    return %arg0, %arg1, %c0_i32 : i32, i32, i32
  }
  func.func @transform_1(%arg0: i32, %arg1: i32, %arg2: i32) -> (i32, i32, i32) {
    %c0_i32 = arith.constant 0 : i32
    %c0_i32_0 = arith.constant 0 : i32
    %c0_i32_1 = arith.constant 0 : i32
    return %arg2, %c0_i32, %c0_i32_0 : i32, i32, i32
  }
  func.func @transform_2(%arg0: i32, %arg1: i32, %arg2: i32) -> (i32, i32, i32, i32) {
    %c0_i32 = arith.constant 0 : i32
    %c0_i32_0 = arith.constant 0 : i32
    return %arg0, %arg2, %arg1, %c0_i32 : i32, i32, i32, i32
  }
}

</mosaic_0001>

<llo_original>
// kernel: tpu_custom_call.1
$region0: #{tpu_custom_call.1}
  #allocation0 [shape = 'u32[]', space=smem, size = 0x4, offset = 0x4, fixed_abs, tag = 'smem constant byte address 0x4 - core index']
  #allocation1 [shape = 'u32[144,128]{1,0:T(1,128)}', space=vmem, size = 0x12000, scoped, tag = 'internal scratch']
  %s0 = inlined_call_operand.hbm [shape: f32[2,8,32], index: 0, kind: input, shape index: {}]
  %s1 = inlined_call_operand.hbm [shape: f32[4,32,32], index: 1, kind: input, shape index: {}]
  %s2 = inlined_call_operand.hbm [shape: f32[2,4,8,32], index: 2, kind: output, shape index: {}]
  %s3 = sld [smem:[#allocation0]]
  $region49: #{tpu_custom_call.1} parent=0
    _
  %s5 = ssub.s32 1, %s3
  %s6 = scalar_select 0, %s5, %s3
  $region1: #{tpu_custom_call.1} parent=0
    #allocation2 [shape = 'u8[8192]{0}', space=vmem, size = 0x2000, scoped, tag = 'input window, operand 0']
    #allocation3 [shape = 's32[2]{0}', space=sflag, size = 0x8, scoped, tag = 'scoped memory for tpu_custom_call.1']
    #allocation4 [shape = 's32[2]{0}', space=sflag, size = 0x8, scoped, tag = 'scoped memory for tpu_custom_call.1']
    #allocation5 [shape = 'u8[32768]{0}', space=vmem, size = 0x8000, scoped, tag = 'input window, operand 1']
    #allocation6 [shape = 's32[2]{0}', space=sflag, size = 0x8, scoped, tag = 'scoped memory for tpu_custom_call.1']
    #allocation7 [shape = 'u8[8192]{0}', space=vmem, size = 0x2000, scoped, tag = 'output window, operand 0']
    %7 = vsyncpa [#allocation3], 0
    %s8 = scalar_lea.sflag [#allocation3], 1
    %9 = vsyncpa %s8, 0
    %10 = vsyncpa [#allocation6], 0
    %s11 = scalar_lea.sflag [#allocation6], 1
    %12 = vsyncpa %s11, 0
    %13 = vsyncpa [#allocation4], 0
    %s14 = scalar_lea.sflag [#allocation4], 1
    %15 = vsyncpa %s14, 0
    loop: start=0, step=1, limit=10
    $region2: #{tpu_custom_call.1} parent=1 // loop_pre_header
      _
    $region3: #{tpu_custom_call.1} parent=1 // loop_header
      %s17 = sphi 0, %s21
      %p18 = scmp.ge.s32.totalorder %s17, 10
      %s24 = sphi 0, %s43
      %s25 = sphi 0, %s39
      %s26 = sphi 0, %s35
      %s27 = sphi 0, %s24
      %s28 = sphi 0, %s25
      %s29 = sphi 0, %s26
      %s30 = sphi 0, %s27
      %s31 = sphi 0, %s28
      %s32 = sphi 0, %s29
      %s48 = sphi 0, %s50
      %s51 = sphi 0, %s48
      %s52 = sphi 0, %s51
      %s68 = sphi 0, %s52
      %s74 = sphi 0, %s76
      %s77 = sphi 0, %s74
      %s78 = sphi 0, %s77
      %s94 = sphi 0, %s78
      %s104 = sphi 0, %s106
      %s107 = sphi 0, %s104
      %s108 = sphi 0, %s107
      %s124 = sphi 0, %s108
    $region4: #{tpu_custom_call.1} parent=1 // loop_header_branch
      %20 = sbr.rel (%p18) target = $region8
    $region5: #{tpu_custom_call.1} parent=1 // loop_body
      %s22 = ssub.s32 %s17, 1
      %s23 = ssub.s32 %s17, 2
      %s33 = sadd.s32 1, %s26
      %p34 = scmp.ge.s32.totalorder %s33, 4
      %s35 = scalar_select %p34, 0, %s33
      %s36 = sadd.s32 1, %s25
      %s37 = scalar_select %p34, %s36, %s25
      %p38 = scmp.ge.s32.totalorder %s37, 1
      %s39 = scalar_select %p38, 0, %s37
      %s40 = sadd.s32 1, %s24
      %s41 = scalar_select %p38, %s40, %s24
      %p42 = scmp.ge.s32.totalorder %s41, 2
      %s43 = scalar_select %p42, 0, %s41
      %s44 = ssub.s32 %s24, %s43
      %s45 = ssub.s32 %s25, %s39
      %s46 = sor.u32 %s44, %s45
      %p47 = scmp.eq.s32.totalorder %s46, 0
      %s49 = sadd.s32 %s48, 1
      %s50 = scalar_select %p47, %s48, %s49
      %p53 = pneg %p47
      %p54 = scmp.eq.s32.totalorder %s17, 7
      %p55 = por %p53, %p54
      %p56 = scmp.ne.s32.totalorder %s48, %s51
      %p57 = scmp.eq.s32.totalorder %s17, 0
      %p58 = por %p56, %p57
      %p59 = scmp.ne.s32.totalorder %s48, %s51
      %p60 = scmp.eq.s32.totalorder %s22, 7
      %p61 = por %p59, %p60
      %p62 = scmp.ne.s32.totalorder %s51, %s52
      %p63 = scmp.eq.s32.totalorder %s22, 0
      %p64 = por %p62, %p63
      %p65 = scmp.ne.s32.totalorder %s51, %s52
      %p66 = scmp.eq.s32.totalorder %s23, 7
      %p67 = por %p65, %p66
      %p69 = scmp.ne.s32.totalorder %s52, %s68
      %p70 = scmp.eq.s32.totalorder %s23, 0
      %p71 = por %p69, %p70
      %s72 = ssub.s32 %s26, %s35
      %p73 = scmp.eq.s32.totalorder %s72, 0
      %s75 = sadd.s32 %s74, 1
      %s76 = scalar_select %p73, %s74, %s75
      %p79 = pneg %p73
      %p80 = scmp.eq.s32.totalorder %s17, 7
      %p81 = por %p79, %p80
      %p82 = scmp.ne.s32.totalorder %s74, %s77
      %p83 = scmp.eq.s32.totalorder %s17, 0
      %p84 = por %p82, %p83
      %p85 = scmp.ne.s32.totalorder %s74, %s77
      %p86 = scmp.eq.s32.totalorder %s22, 7
      %p87 = por %p85, %p86
      %p88 = scmp.ne.s32.totalorder %s77, %s78
      %p89 = scmp.eq.s32.totalorder %s22, 0
      %p90 = por %p88, %p89
      %p91 = scmp.ne.s32.totalorder %s77, %s78
      %p92 = scmp.eq.s32.totalorder %s23, 7
      %p93 = por %p91, %p92
      %p95 = scmp.ne.s32.totalorder %s78, %s94
      %p96 = scmp.eq.s32.totalorder %s23, 0
      %p97 = por %p95, %p96
      %s98 = ssub.s32 %s24, %s43
      %s99 = ssub.s32 %s26, %s35
      %s100 = sor.u32 %s98, %s99
      %s101 = ssub.s32 %s25, %s39
      %s102 = sor.u32 %s100, %s101
      %p103 = scmp.eq.s32.totalorder %s102, 0
      %s105 = sadd.s32 %s104, 1
      %s106 = scalar_select %p103, %s104, %s105
      %p109 = pneg %p103
      %p110 = scmp.eq.s32.totalorder %s17, 7
      %p111 = por %p109, %p110
      %p112 = scmp.ne.s32.totalorder %s104, %s107
      %p113 = scmp.eq.s32.totalorder %s17, 0
      %p114 = por %p112, %p113
      %p115 = scmp.ne.s32.totalorder %s104, %s107
      %p116 = scmp.eq.s32.totalorder %s22, 7
      %p117 = por %p115, %p116
      %p118 = scmp.ne.s32.totalorder %s107, %s108
      %p119 = scmp.eq.s32.totalorder %s22, 0
      %p120 = por %p118, %p119
      %p121 = scmp.ne.s32.totalorder %s107, %s108
      %p122 = scmp.eq.s32.totalorder %s23, 7
      %p123 = por %p121, %p122
      %p125 = scmp.ne.s32.totalorder %s108, %s124
      %p126 = scmp.eq.s32.totalorder %s23, 0
      %p127 = por %p125, %p126
      %p128 = scmp.le.s32.totalorder 1, %s17
      %p129 = scmp.lt.s32.totalorder %s17, 9
      %p130 = pnand %p128, %p129
      %p131 = pneg %p130
      // Predicated region
      $region9: #{tpu_custom_call.1} parent=5 // pred_check
        _
      $region10: #{tpu_custom_call.1} parent=5 // pred_check_branch
        %133 = sbr.rel (%p130) target = $region12
      $region11: #{tpu_custom_call.1} parent=5 // pred_region
        %s134 = ssub.s32 %s17, 1
      $region12: #{tpu_custom_call.1} parent=5 // pred_fallthru
        _
      %p135 = scmp.lt.s32.totalorder %s17, 8
      // Predicated region
      $region13: #{tpu_custom_call.1} parent=5 // pred_check
        %p136 = pneg %p135
      $region14: #{tpu_custom_call.1} parent=5 // pred_check_branch
        %138 = sbr.rel (%p136) target = $region16
      $region15: #{tpu_custom_call.1} parent=5 // pred_region
        // Predicated region
        $region17: #{tpu_custom_call.1} parent=15 // pred_check
          %p139 = pneg %p58
        $region18: #{tpu_custom_call.1} parent=15 // pred_check_branch
          %141 = sbr.rel (%p139) target = $region20
        $region19: #{tpu_custom_call.1} parent=15 // pred_region
          %s142 = sand.u32 %s48, 1
          %s143 = scalar_lea.sflag [#allocation3], %s142
          %s144 = sand.u32 %s48, 1
          %s145 = smul.addr %s144, 8
          %s146 = scalar_lea.vmem [#allocation2], %s145
          %s148 = ssub.s32 128, 128
          %149 = vsyncadd %s143, %s148
          %s150 = sadd.s32 %s25, %s24
          %s151 = smul.addr %s150, 128
          %s152 = scalar_lea.hbm %s0, %s151
          %s154 = sshll.u32 %s146, 4
          %s155 = int_to_ptr.vmem [resolvable:$true] %s154
          %157 = dma.hbm_to_vmem [thread:$0]  %s152, 128, %s155, %s143
        $region20: #{tpu_custom_call.1} parent=15 // pred_fallthru
          _
        // Predicated region
        $region21: #{tpu_custom_call.1} parent=15 // pred_check
          %p158 = pneg %p84
        $region22: #{tpu_custom_call.1} parent=15 // pred_check_branch
          %160 = sbr.rel (%p158) target = $region24
        $region23: #{tpu_custom_call.1} parent=15 // pred_region
          %s161 = sand.u32 %s74, 1
          %s162 = scalar_lea.sflag [#allocation6], %s161
          %s163 = sand.u32 %s74, 1
          %s164 = smul.addr %s163, 32
          %s165 = scalar_lea.vmem [#allocation5], %s164
          %s167 = ssub.s32 512, 512
          %168 = vsyncadd %s162, %s167
          %s169 = smul.addr %s26, 4
          %s170 = smul.addr %s169, 128
          %s171 = scalar_lea.hbm %s1, %s170
          %s172 = sshll.u32 %s165, 4
          %s173 = int_to_ptr.vmem [resolvable:$true] %s172
          %178 = dma.hbm_to_vmem [thread:$0]  %s171, 512, %s173, %s162, 128, 128, 8
        $region24: #{tpu_custom_call.1} parent=15 // pred_fallthru
          _
      $region16: #{tpu_custom_call.1} parent=5 // pred_fallthru
        _
      %p179 = scmp.le.s32.totalorder 1, %s17
      %p180 = scmp.lt.s32.totalorder %s17, 9
      %p181 = pnand %p179, %p180
      %p182 = pneg %p181
      // Predicated region
      $region25: #{tpu_custom_call.1} parent=5 // pred_check
        _
      $region26: #{tpu_custom_call.1} parent=5 // pred_check_branch
        %184 = sbr.rel (%p181) target = $region28
      $region27: #{tpu_custom_call.1} parent=5 // pred_region
        %s185 = ssub.s32 %s17, 1
        %s186 = sand.u32 %s51, 1
        %s187 = scalar_lea.sflag [#allocation3], %s186
        %s188 = sand.u32 %s51, 1
        %s189 = smul.addr %s188, 8
        %s190 = scalar_lea.vmem [#allocation2], %s189
        // Predicated region
        $region29: #{tpu_custom_call.1} parent=27 // pred_check
          %p191 = pneg %p64
        $region30: #{tpu_custom_call.1} parent=27 // pred_check_branch
          %193 = sbr.rel (%p191) target = $region32
        $region31: #{tpu_custom_call.1} parent=27 // pred_region
          %194 = dma.done %s187, 128
        $region32: #{tpu_custom_call.1} parent=27 // pred_fallthru
          _
        %s195 = sand.u32 %s77, 1
        %s196 = scalar_lea.sflag [#allocation6], %s195
        %s197 = sand.u32 %s77, 1
        %s198 = smul.addr %s197, 32
        %s199 = scalar_lea.vmem [#allocation5], %s198
        // Predicated region
        $region33: #{tpu_custom_call.1} parent=27 // pred_check
          %p200 = pneg %p90
        $region34: #{tpu_custom_call.1} parent=27 // pred_check_branch
          %202 = sbr.rel (%p200) target = $region36
        $region35: #{tpu_custom_call.1} parent=27 // pred_region
          %203 = dma.done %s196, 512
        $region36: #{tpu_custom_call.1} parent=27 // pred_fallthru
          _
        %s204 = sand.u32 %s51, 1
        %s205 = scalar_lea.sflag [#allocation3], %s204
        %s206 = sand.u32 %s51, 1
        %s207 = smul.addr %s206, 8
        %s208 = scalar_lea.vmem [#allocation2], %s207
        %p209 = pneg %p64
        %p210 = pneg %p61
        %s211 = sand.u32 %s77, 1
        %s212 = scalar_lea.sflag [#allocation6], %s211
        %s213 = sand.u32 %s77, 1
        %s214 = smul.addr %s213, 32
        %s215 = scalar_lea.vmem [#allocation5], %s214
        %p216 = pneg %p90
        %p217 = pneg %p87
        %p218 = pneg %p120
        %p219 = pneg %p117
        %s220 = sand.u32 %s107, 1
        %s221 = scalar_lea.sflag [#allocation4], %s220
        %s222 = sand.u32 %s107, 1
        %s223 = smul.addr %s222, 8
        %s224 = scalar_lea.vmem [#allocation7], %s223
        %v225 = vld [vmem:[%s190] sm:$0xff]
        %v226 = vld [vmem:[%s199] sm:$0xff]
        %v227 = vld [vmem:[%s199 + $0x8] sm:$0xff]
        %v228 = vld [vmem:[%s199 + $0x10] sm:$0xff]
        %v229 = vld [vmem:[%s199 + $0x18] sm:$0xff]
        %vm230 = vcmask 261120
        %v232 = vsel %vm230, %v225, 0
        %234 = vmatprep.subr.mxu0 0.0
        %235 = vmatpush1.msra.mxu0 0.0
        %236 = vmatprep.subr.mxu0 0.0
        %237 = vmatpush1.msra.mxu0 0.0
        %238 = vmatprep.subr.mxu0 0.0
        %239 = vmatpush1.msra.mxu0 0.0
        %240 = vmatprep.subr.mxu0 0.0
        %241 = vmatpush1.msra.mxu0 0.0
        %242 = vmatprep.subr.mxu0 0.0
        %243 = vmatpush1.msra.mxu0 0.0
        %244 = vmatprep.subr.mxu0 0.0
        %245 = vmatpush1.msra.mxu0 0.0
        %246 = vmatprep.subr.mxu0 0.0
        %247 = vmatpush1.msra.mxu0 0.0
        %248 = vmatprep.subr.mxu0 0.0
        %249 = vmatpush1.msra.mxu0 0.0
        %250 = vmatprep.subr.mxu0 0.0
        %251 = vmatpush1.msra.mxu0 0.0
        %252 = vmatprep.subr.mxu0 0.0
        %253 = vmatpush1.msra.mxu0 0.0
        %254 = vmatprep.subr.mxu0 0.0
        %255 = vmatpush1.msra.mxu0 0.0
        %256 = vmatprep.subr.mxu0 0.0
        %257 = vmatpush1.msra.mxu0 0.0
        %258 = vmatprep.subr.mxu0 0.0
        %259 = vmatpush1.msra.mxu0 %v229
        %260 = vmatprep.subr.mxu0 0.0
        %261 = vmatpush1.msra.mxu0 %v228
        %262 = vmatprep.subr.mxu0 0.0
        %263 = vmatpush1.msra.mxu0 %v227
        %264 = vmatprep.subr.mxu0 0.0
        %265 = vmatpush1.msra.mxu0 %v226
        %266 = vmatprep.subr.mxu0 0.0
        %267 = vmatpush2.msra.mxu0 0.0
        %268 = vmatprep.subr.mxu0 0.0
        %269 = vmatpush2.msra.mxu0 0.0
        %270 = vmatprep.subr.mxu0 0.0
        %271 = vmatpush2.msra.mxu0 0.0
        %272 = vmatprep.subr.mxu0 0.0
        %273 = vmatpush2.msra.mxu0 0.0
        %274 = vmatprep.subr.mxu0 0.0
        %275 = vmatpush2.msra.mxu0 0.0
        %276 = vmatprep.subr.mxu0 0.0
        %277 = vmatpush2.msra.mxu0 0.0
        %278 = vmatprep.subr.mxu0 0.0
        %279 = vmatpush2.msra.mxu0 0.0
        %280 = vmatprep.subr.mxu0 0.0
        %281 = vmatpush2.msra.mxu0 0.0
        %282 = vmatprep.subr.mxu0 0.0
        %283 = vmatpush2.msra.mxu0 0.0
        %284 = vmatprep.subr.mxu0 0.0
        %285 = vmatpush2.msra.mxu0 0.0
        %286 = vmatprep.subr.mxu0 0.0
        %287 = vmatpush2.msra.mxu0 0.0
        %288 = vmatprep.subr.mxu0 0.0
        %289 = vmatpush2.msra.mxu0 0.0
        %290 = vmatprep.subr.mxu0 0.0
        %291 = vmatpush2.msra.mxu0 0.0
        %292 = vmatprep.subr.mxu0 0.0
        %293 = vmatpush2.msra.mxu0 0.0
        %294 = vmatprep.subr.mxu0 0.0
        %295 = vmatpush2.msra.mxu0 0.0
        %296 = vmatprep.subr.mxu0 0.0
        %297 = vmatpush2.msra.mxu0 0.0
        %298 = vmatprep.mubr.f32.mxu0 0.0
        %299 = vmatmul.mubr.f32.gmra.mxu0 %v232
        %v300 = vpop.f32.mrf.mxu0
        %v301 = vadd.f32 0.0, %v300
        %v302 = vpop.f32.mrf.mxu0
        %303 = vdwg.mxu0
        %304 = vst.msk [vmem:[%s224] sm:$0xff] %vm230, %v301
        %s305 = sand.u32 %s107, 1
        %s306 = scalar_lea.sflag [#allocation4], %s305
        %s307 = sand.u32 %s107, 1
        %s308 = smul.addr %s307, 8
        %s309 = scalar_lea.vmem [#allocation7], %s308
        // Predicated region
        $region37: #{tpu_custom_call.1} parent=27 // pred_check
          %p310 = pneg %p117
        $region38: #{tpu_custom_call.1} parent=27 // pred_check_branch
          %312 = sbr.rel (%p310) target = $region40
        $region39: #{tpu_custom_call.1} parent=27 // pred_region
          %s314 = ssub.s32 128, 128
          %315 = vsyncadd %s306, %s314
          %s316 = sadd.s32 %s28, %s29
          %s317 = smul.addr %s27, 4
          %s318 = sadd.s32 %s316, %s317
          %s319 = smul.addr %s318, 128
          %s320 = scalar_lea.hbm %s2, %s319
          %s322 = sshll.u32 %s309, 4
          %s323 = int_to_ptr.vmem [resolvable:$true] %s322
          %325 = dma.vmem_to_hbm [thread:$0]  %s323, 128, %s320, %s306
        $region40: #{tpu_custom_call.1} parent=27 // pred_fallthru
          _
      $region28: #{tpu_custom_call.1} parent=5 // pred_fallthru
        _
      %p326 = scmp.le.s32.totalorder 2, %s17
      // Predicated region
      $region41: #{tpu_custom_call.1} parent=5 // pred_check
        %p327 = pneg %p326
      $region42: #{tpu_custom_call.1} parent=5 // pred_check_branch
        %329 = sbr.rel (%p327) target = $region44
      $region43: #{tpu_custom_call.1} parent=5 // pred_region
        %s330 = ssub.s32 %s17, 2
        // Predicated region
        $region45: #{tpu_custom_call.1} parent=43 // pred_check
          %p331 = pneg %p123
        $region46: #{tpu_custom_call.1} parent=43 // pred_check_branch
          %333 = sbr.rel (%p331) target = $region48
        $region47: #{tpu_custom_call.1} parent=43 // pred_region
          %s334 = sand.u32 %s108, 1
          %s335 = scalar_lea.sflag [#allocation4], %s334
          %s336 = sand.u32 %s108, 1
          %s337 = smul.addr %s336, 8
          %s338 = scalar_lea.vmem [#allocation7], %s337
          %339 = dma.done %s335, 128
        $region48: #{tpu_custom_call.1} parent=43 // pred_fallthru
          _
      $region44: #{tpu_custom_call.1} parent=5 // pred_fallthru
        _
    $region6: #{tpu_custom_call.1} parent=1 // loop_footer
      %s21 = sadd.s32 1, %s17
    $region7: #{tpu_custom_call.1} parent=1 // loop_footer_branch
      %16 = sbr.rel target = $region3
    $region8: #{tpu_custom_call.1} parent=1 // loop_exit
      _
    %340 = vsyncpa [#allocation3], 1
    %s341 = scalar_lea.sflag [#allocation3], 1
    %342 = vsyncpa %s341, 1
    %343 = vsyncpa [#allocation6], 1
    %s344 = scalar_lea.sflag [#allocation6], 1
    %345 = vsyncpa %s344, 1
    %346 = vsyncpa [#allocation4], 1
    %s347 = scalar_lea.sflag [#allocation4], 1
    %348 = vsyncpa %s347, 1

</llo_original>
